<compile_context>
chip_gen: v6e
topology: v6e:2x2x1
jax: 0.10.0
libtpu: 0.0.40
codegen_flags: <defaults>
</compile_context>

<pallas_src>
import math

import jax
import jax.numpy as jnp
from jax import lax
from jax.experimental import pallas as pl
from jax.experimental.pallas import tpu as pltpu


def _round_up(x, m):
    return ((x + m - 1) // m) * m


def _ffn_geglu_kernel(x_ref, wv_ref, wg_ref, bv_ref, bg_ref, w2_ref, b2_ref,
                      o_ref, acc_ref):
    """One (row-tile, inner-tile) step of the fused GEGLU feed-forward.

    x_ref : (tm, dim_p)       input row tile (native dtype)
    wv_ref: (dim_p, tk)       value-half of W1, column tile
    wg_ref: (dim_p, tk)       gate-half of W1, column tile
    bv_ref: (1, tk)           value bias chunk
    bg_ref: (1, tk)           gate bias chunk
    w2_ref: (tk, dout_p)      W2 row tile
    b2_ref: (1, dout_p)       output bias
    o_ref : (tm, dout_p)      output row tile (written on last k step)
    acc_ref:(tm, dout_p) f32  VMEM accumulator across the inner-dim grid axis
    """
    k = pl.program_id(1)

    @pl.when(k == 0)
    def _init():
        acc_ref[...] = jnp.zeros_like(acc_ref)

    x = x_ref[...]  # native dtype straight to the MXU, f32 accumulation
    value = jnp.dot(x, wv_ref[...], preferred_element_type=jnp.float32)
    value = value + bv_ref[...].astype(jnp.float32)
    gate = jnp.dot(x, wg_ref[...], preferred_element_type=jnp.float32)
    gate = gate + bg_ref[...].astype(jnp.float32)

    # Exact (erf-based) GELU, matching torch.nn.functional.gelu default.
    inv_sqrt2 = 1.0 / math.sqrt(2.0)
    g = value * (0.5 * gate * (1.0 + lax.erf(gate * inv_sqrt2)))

    # Dropout(p=0.0) is identity at inference -> nothing to do.
    # TODO(synk): training-mode dropout (p > 0) not implemented.

    # Second matmul for this inner chunk, accumulated in f32 scratch.
    acc_ref[...] += jnp.dot(g.astype(w2_ref.dtype), w2_ref[...],
                            preferred_element_type=jnp.float32)

    @pl.when(k == pl.num_programs(1) - 1)
    def _finish():
        o_ref[...] = (acc_ref[...] + b2_ref[...].astype(jnp.float32)
                      ).astype(o_ref.dtype)


def feed_forward_geglu(x, w1, b1, w2, b2, *, tm=256, tk=512):
    """FeedForward forward pass.  x: [B, S, dim] -> [B, S, dim_out].

    w1: [dim, 2*inner] ([in, out] layout), b1: [2*inner]
    w2: [inner, dim_out],                  b2: [dim_out]
    """
    B, S, dim = x.shape
    inner = w1.shape[1] // 2
    dim_out = w2.shape[1]
    out_dtype = x.dtype

    # Split GEGLU projection into value / gate halves (one-time, outside kernel).
    wv, wg = w1[:, :inner], w1[:, inner:]
    bv, bg = b1[:inner], b1[inner:]

    rows = B * S

    # Tile sizes: big row tile for MXU utilization, clamped for tiny inputs;
    # inner (reduction) tile lane-aligned.
    tm = min(tm, _round_up(rows, 8))
    tk = _round_up(min(tk, _round_up(inner, 128)), 128)

    # Pad to TPU-friendly / lane-dense shapes; sliced back at the end.
    rows_p = _round_up(rows, tm)
    dim_p = _round_up(dim, 128)
    inner_p = _round_up(inner, tk)
    dout_p = _round_up(dim_out, 128)

    x2d = jnp.pad(x.reshape(rows, dim),
                  ((0, rows_p - rows), (0, dim_p - dim)))
    wv_p = jnp.pad(wv, ((0, dim_p - dim), (0, inner_p - inner)))
    wg_p = jnp.pad(wg, ((0, dim_p - dim), (0, inner_p - inner)))
    bv_p = jnp.pad(bv, (0, inner_p - inner)).reshape(1, inner_p)
    bg_p = jnp.pad(bg, (0, inner_p - inner)).reshape(1, inner_p)
    w2_p = jnp.pad(w2, ((0, inner_p - inner), (0, dout_p - dim_out)))
    b2_p = jnp.pad(b2, (0, dout_p - dim_out)).reshape(1, dout_p)

    grid = (rows_p // tm, inner_p // tk)

    itemsize = jnp.dtype(x.dtype).itemsize
    cost = pl.CostEstimate(
        flops=2 * rows * dim * (2 * inner) + 2 * rows * inner * dim_out,
        transcendentals=rows * inner,
        bytes_accessed=(x2d.size + wv_p.size + wg_p.size + w2_p.size
                        + rows_p * dout_p) * itemsize,
    )

    out2d = pl.pallas_call(
        _ffn_geglu_kernel,
        out_shape=jax.ShapeDtypeStruct((rows_p, dout_p), out_dtype),
        grid_spec=pltpu.PrefetchScalarGridSpec(
            num_scalar_prefetch=0,
            grid=grid,
            in_specs=[
                pl.BlockSpec((tm, dim_p), lambda i, k: (i, 0)),    # x rows
                pl.BlockSpec((dim_p, tk), lambda i, k: (0, k)),    # W_value cols
                pl.BlockSpec((dim_p, tk), lambda i, k: (0, k)),    # W_gate cols
                pl.BlockSpec((1, tk), lambda i, k: (0, k)),        # b_value
                pl.BlockSpec((1, tk), lambda i, k: (0, k)),        # b_gate
                pl.BlockSpec((tk, dout_p), lambda i, k: (k, 0)),   # W2 rows
                pl.BlockSpec((1, dout_p), lambda i, k: (0, 0)),    # b2
            ],
            out_specs=pl.BlockSpec((tm, dout_p), lambda i, k: (i, 0)),
            scratch_shapes=[pltpu.VMEM((tm, dout_p), jnp.float32)],
        ),
        compiler_params=pltpu.CompilerParams(
            dimension_semantics=("parallel", "arbitrary"),
            vmem_limit_bytes=48 * 1024 * 1024,
        ),
        cost_estimate=cost,
    )(x2d, wv_p, wg_p, bv_p, bg_p, w2_p, b2_p)

    return out2d[:rows, :dim_out].reshape(B, S, dim_out)


def init_feed_forward_params(key, dim, dim_out=None, mult=4, dtype=jnp.float32):
    """Deterministic synthetic params (shapes match the PyTorch module)."""
    inner_dim = int(dim * mult)
    dim_out = dim_out if dim_out is not None else dim
    k1, k2, k3, k4 = jax.random.split(key, 4)
    w1 = jax.random.normal(k1, (dim, inner_dim * 2), dtype) * 0.02
    b1 = jax.random.normal(k2, (inner_dim * 2,), dtype) * 0.02
    w2 = jax.random.normal(k3, (inner_dim, dim_out), dtype) * 0.02
    b2 = jax.random.normal(k4, (dim_out,), dtype) * 0.02
    return w1, b1, w2, b2


def _reference(x, w1, b1, w2, b2):
    """Plain-JAX reference of the same math."""
    hp = jax.lax.Precision.HIGHEST
    h = jnp.einsum("bsd,df->bsf", x, w1, precision=hp) + b1
    inner = w2.shape[0]
    value, gate = h[..., :inner], h[..., inner:]
    g = value * (0.5 * gate * (1.0 + jax.lax.erf(gate / jnp.sqrt(2.0))))
    return jnp.einsum("bsf,fo->bso", g, w2, precision=hp) + b2


if __name__ == "__main__":
    key = jax.random.PRNGKey(0)

    # Case 1: small shapes consistent with the module: batch=2, seq=8, dim=32
    # -> inner_dim = 128, dim_out = 32.
    B, S, dim = 2, 8, 32
    kx, kp, kx2, kp2 = jax.random.split(key, 4)
    x = jax.random.normal(kx, (B, S, dim), jnp.float32)
    w1, b1, w2, b2 = init_feed_forward_params(kp, dim)

    out = jax.block_until_ready(feed_forward_geglu(x, w1, b1, w2, b2))
    ref = _reference(x, w1, b1, w2, b2)
    assert out.shape == (B, S, dim)
    assert jnp.allclose(out, ref, atol=1e-5, rtol=1e-5), "mismatch (case 1)"

    # Case 2: awkward (non-multiple) shapes to exercise the padding path.
    B2, S2, dim2 = 2, 5, 48
    x2 = jax.random.normal(kx2, (B2, S2, dim2), jnp.float32)
    p2 = init_feed_forward_params(kp2, dim2)
    out2 = jax.block_until_ready(feed_forward_geglu(x2, *p2))
    ref2 = _reference(x2, *p2)
    assert out2.shape == (B2, S2, dim2)
    assert jnp.allclose(out2, ref2, atol=1e-5, rtol=1e-5), "mismatch (case 2)"

    print("KERNEL_OK")
</pallas_src>

<mosaic_0001>
module attributes {stable_mosaic.version = 11 : i64} {
  func.func @_ffn_geglu_kernel(%arg0: i32, %arg1: i32, %arg2: memref<16x128xf32, #tpu.memory_space<vmem>>, %arg3: memref<128x128xf32, #tpu.memory_space<vmem>>, %arg4: memref<128x128xf32, #tpu.memory_space<vmem>>, %arg5: memref<1x128xf32, #tpu.memory_space<vmem>>, %arg6: memref<1x128xf32, #tpu.memory_space<vmem>>, %arg7: memref<128x128xf32, #tpu.memory_space<vmem>>, %arg8: memref<1x128xf32, #tpu.memory_space<vmem>>, %arg9: memref<16x128xf32, #tpu.memory_space<vmem>>, %arg10: memref<16x128xf32, #tpu.memory_space<vmem>>) attributes {dimension_semantics = [#tpu.dimension_semantics<parallel>, #tpu.dimension_semantics<arbitrary>], iteration_bounds = array<i64: 1, 1>, scalar_prefetch = 0 : i64, scratch_operands = 1 : i64, tpu.core_type = #tpu.core_type<tc>, window_params = [{transform_indices = @transform_0, window_bounds = array<i64: 16, 128>}, {transform_indices = @transform_1, window_bounds = array<i64: 128, 128>}, {transform_indices = @transform_2, window_bounds = array<i64: 128, 128>}, {transform_indices = @transform_3, window_bounds = array<i64: 1, 128>}, {transform_indices = @transform_4, window_bounds = array<i64: 1, 128>}, {transform_indices = @transform_5, window_bounds = array<i64: 128, 128>}, {pipeline_mode = #tpu.pipeline_mode<synchronous>, transform_indices = @transform_6, window_bounds = array<i64: 1, 128>}, {transform_indices = @transform_7, window_bounds = array<i64: 16, 128>}]} {
    %c0_i32 = arith.constant 0 : i32
    %0 = arith.cmpi eq, %arg1, %c0_i32 : i32
    %1 = arith.extui %0 : i1 to i32
    %c0_i32_0 = arith.constant 0 : i32
    %2 = arith.cmpi ne, %1, %c0_i32_0 : i32
    scf.if %2 {
      %cst_23 = arith.constant 0.000000e+00 : f32
      %31 = vector.broadcast %cst_23 : f32 to vector<16x128xf32>
      %c0_24 = arith.constant 0 : index
      %c0_25 = arith.constant 0 : index
      %32 = vector.load %arg10[%c0_24, %c0_25] : memref<16x128xf32, #tpu.memory_space<vmem>>, vector<16x128xf32>
      tpu.vector_store %arg10[%c0_24, %c0_25], %31 {strides = array<i32>} : memref<16x128xf32, #tpu.memory_space<vmem>>, vector<16x128xf32>,
    } else {
    }
    %c0 = arith.constant 0 : index
    %c0_1 = arith.constant 0 : index
    %3 = vector.load %arg2[%c0, %c0_1] : memref<16x128xf32, #tpu.memory_space<vmem>>, vector<16x128xf32>
    %c0_2 = arith.constant 0 : index
    %c0_3 = arith.constant 0 : index
    %4 = vector.load %arg3[%c0_2, %c0_3] : memref<128x128xf32, #tpu.memory_space<vmem>>, vector<128x128xf32>
    %cst = arith.constant dense<0.000000e+00> : vector<16x128xf32>
    %5 = tpu.matmul %3, %4, %cst {dimension_numbers = #tpu.dot_dimension_numbers<[1], [0], [0], [1], [0, 0, 1, 1], [], []>} : vector<16x128xf32>, vector<128x128xf32>, vector<16x128xf32> -> vector<16x128xf32>
    %c0_4 = arith.constant 0 : index
    %c0_5 = arith.constant 0 : index
    %6 = vector.load %arg5[%c0_4, %c0_5] : memref<1x128xf32, #tpu.memory_space<vmem>>, vector<1x128xf32>
    %7 = vector.broadcast %6 : vector<1x128xf32> to vector<16x128xf32>
    %8 = arith.addf %5, %7 : vector<16x128xf32>
    %c0_6 = arith.constant 0 : index
    %c0_7 = arith.constant 0 : index
    %9 = vector.load %arg4[%c0_6, %c0_7] : memref<128x128xf32, #tpu.memory_space<vmem>>, vector<128x128xf32>
    %cst_8 = arith.constant dense<0.000000e+00> : vector<16x128xf32>
    %10 = tpu.matmul %3, %9, %cst_8 {dimension_numbers = #tpu.dot_dimension_numbers<[1], [0], [0], [1], [0, 0, 1, 1], [], []>} : vector<16x128xf32>, vector<128x128xf32>, vector<16x128xf32> -> vector<16x128xf32>
    %c0_9 = arith.constant 0 : index
    %c0_10 = arith.constant 0 : index
    %11 = vector.load %arg6[%c0_9, %c0_10] : memref<1x128xf32, #tpu.memory_space<vmem>>, vector<1x128xf32>
    %12 = vector.broadcast %11 : vector<1x128xf32> to vector<16x128xf32>
    %13 = arith.addf %10, %12 : vector<16x128xf32>
    %cst_11 = arith.constant 5.000000e-01 : f32
    %14 = vector.broadcast %cst_11 : f32 to vector<16x128xf32>
    %15 = arith.mulf %14, %13 : vector<16x128xf32>
    %cst_12 = arith.constant 0.707106769 : f32
    %16 = vector.broadcast %cst_12 : f32 to vector<16x128xf32>
    %17 = arith.mulf %13, %16 : vector<16x128xf32>
    %18 = math.erf %17 : vector<16x128xf32>
    %cst_13 = arith.constant 1.000000e+00 : f32
    %19 = vector.broadcast %cst_13 : f32 to vector<16x128xf32>
    %20 = arith.addf %19, %18 : vector<16x128xf32>
    %21 = arith.mulf %15, %20 : vector<16x128xf32>
    %22 = arith.mulf %8, %21 : vector<16x128xf32>
    %c0_14 = arith.constant 0 : index
    %c0_15 = arith.constant 0 : index
    %23 = vector.load %arg10[%c0_14, %c0_15] : memref<16x128xf32, #tpu.memory_space<vmem>>, vector<16x128xf32>
    %c0_16 = arith.constant 0 : index
    %c0_17 = arith.constant 0 : index
    %24 = vector.load %arg7[%c0_16, %c0_17] : memref<128x128xf32, #tpu.memory_space<vmem>>, vector<128x128xf32>
    %cst_18 = arith.constant dense<0.000000e+00> : vector<16x128xf32>
    %25 = tpu.matmul %22, %24, %cst_18 {dimension_numbers = #tpu.dot_dimension_numbers<[1], [0], [0], [1], [0, 0, 1, 1], [], []>} : vector<16x128xf32>, vector<128x128xf32>, vector<16x128xf32> -> vector<16x128xf32>
    %26 = arith.addf %23, %25 : vector<16x128xf32>
    %c0_19 = arith.constant 0 : index
    %c0_20 = arith.constant 0 : index
    %27 = vector.load %arg10[%c0_19, %c0_20] : memref<16x128xf32, #tpu.memory_space<vmem>>, vector<16x128xf32>
    tpu.vector_store %arg10[%c0_19, %c0_20], %26 {strides = array<i32>} : memref<16x128xf32, #tpu.memory_space<vmem>>, vector<16x128xf32>,
    %c0_i32_21 = arith.constant 0 : i32
    %28 = arith.cmpi eq, %arg1, %c0_i32_21 : i32
    %29 = arith.extui %28 : i1 to i32
    %c0_i32_22 = arith.constant 0 : i32
    %30 = arith.cmpi ne, %29, %c0_i32_22 : i32
    scf.if %30 {
      %c0_23 = arith.constant 0 : index
      %c0_24 = arith.constant 0 : index
      %31 = vector.load %arg10[%c0_23, %c0_24] : memref<16x128xf32, #tpu.memory_space<vmem>>, vector<16x128xf32>
      %c0_25 = arith.constant 0 : index
      %c0_26 = arith.constant 0 : index
      %32 = vector.load %arg8[%c0_25, %c0_26] : memref<1x128xf32, #tpu.memory_space<vmem>>, vector<1x128xf32>
      %33 = vector.broadcast %32 : vector<1x128xf32> to vector<16x128xf32>
      %34 = arith.addf %31, %33 : vector<16x128xf32>
      %c0_27 = arith.constant 0 : index
      %c0_28 = arith.constant 0 : index
      %35 = vector.load %arg9[%c0_27, %c0_28] : memref<16x128xf32, #tpu.memory_space<vmem>>, vector<16x128xf32>
      tpu.vector_store %arg9[%c0_27, %c0_28], %34 {strides = array<i32>} : memref<16x128xf32, #tpu.memory_space<vmem>>, vector<16x128xf32>,
    } else {
    }
    return
  }
  func.func @transform_0(%arg0: i32, %arg1: i32) -> (i32, i32) {
    %c0_i32 = arith.constant 0 : i32
    %c0_i32_0 = arith.constant 0 : i32
    return %arg0, %c0_i32 : i32, i32
  }
  func.func @transform_1(%arg0: i32, %arg1: i32) -> (i32, i32) {
    %c0_i32 = arith.constant 0 : i32
    %c0_i32_0 = arith.constant 0 : i32
    return %c0_i32, %arg1 : i32, i32
  }
  func.func @transform_2(%arg0: i32, %arg1: i32) -> (i32, i32) {
    %c0_i32 = arith.constant 0 : i32
    %c0_i32_0 = arith.constant 0 : i32
    return %c0_i32, %arg1 : i32, i32
  }
  func.func @transform_3(%arg0: i32, %arg1: i32) -> (i32, i32) {
    %c0_i32 = arith.constant 0 : i32
    %c0_i32_0 = arith.constant 0 : i32
    return %c0_i32, %arg1 : i32, i32
  }
  func.func @transform_4(%arg0: i32, %arg1: i32) -> (i32, i32) {
    %c0_i32 = arith.constant 0 : i32
    %c0_i32_0 = arith.constant 0 : i32
    return %c0_i32, %arg1 : i32, i32
  }
  func.func @transform_5(%arg0: i32, %arg1: i32) -> (i32, i32) {
    %c0_i32 = arith.constant 0 : i32
    %c0_i32_0 = arith.constant 0 : i32
    return %arg1, %c0_i32 : i32, i32
  }
  func.func @transform_6(%arg0: i32, %arg1: i32) -> (i32, i32) {
    %c0_i32 = arith.constant 0 : i32
    %c0_i32_0 = arith.constant 0 : i32
    %c0_i32_1 = arith.constant 0 : i32
    return %c0_i32, %c0_i32_0 : i32, i32
  }
  func.func @transform_7(%arg0: i32, %arg1: i32) -> (i32, i32) {
    %c0_i32 = arith.constant 0 : i32
    %c0_i32_0 = arith.constant 0 : i32
    return %arg0, %c0_i32 : i32, i32
  }
}

</mosaic_0001>

<llo_original>
// kernel: tpu_custom_call.1
$region0: #{tpu_custom_call.1}
  #allocation0 [shape = 'u32[]', space=smem, size = 0x4, offset = 0x4, fixed_abs, tag = 'smem constant byte address 0x4 - core index']
  #allocation1 [shape = 'u32[144,128]{1,0:T(1,128)}', space=vmem, size = 0x12000, scoped, tag = 'internal scratch']
  #allocation2 [shape = 'f32[16,128]{1,0:T(8,128)}', space=vmem, size = 0x2000, scoped, tag = 'scratch operand']
  %s0 = inlined_call_operand.hbm [shape: f32[16,128], index: 0, kind: input, shape index: {}]
  %s1 = inlined_call_operand.hbm [shape: f32[128,128], index: 1, kind: input, shape index: {}]
  %s2 = inlined_call_operand.hbm [shape: f32[128,128], index: 2, kind: input, shape index: {}]
  %s3 = inlined_call_operand.vmem [shape: f32[1,128], index: 3, kind: input, shape index: {}]
  %s4 = inlined_call_operand.vmem [shape: f32[1,128], index: 4, kind: input, shape index: {}]
  %s5 = inlined_call_operand.hbm [shape: f32[128,128], index: 5, kind: input, shape index: {}]
  %s6 = inlined_call_operand.vmem [shape: f32[1,128], index: 6, kind: input, shape index: {}]
  %s7 = inlined_call_operand.hbm [shape: f32[16,128], index: 7, kind: output, shape index: {}]
  %s8 = sld [smem:[#allocation0]]
  $region62: #{tpu_custom_call.1} parent=0
    _
  %s10 = ssub.s32 1, %s8
  %s11 = scalar_select 0, %s10, %s8
  $region1: #{tpu_custom_call.1} parent=0
    #allocation3 [shape = 'u8[8192]{0}', space=vmem, size = 0x2000, scoped, tag = 'input window, operand 0, single buffered']
    #allocation4 [shape = 's32[1]{0}', space=sflag, size = 0x4, scoped, tag = 'scoped memory for tpu_custom_call.1']
    #allocation5 [shape = 's32[1]{0}', space=sflag, size = 0x4, scoped, tag = 'scoped memory for tpu_custom_call.1']
    #allocation6 [shape = 'u8[65536]{0}', space=vmem, size = 0x10000, scoped, tag = 'input window, operand 1, single buffered']
    #allocation7 [shape = 's32[1]{0}', space=sflag, size = 0x4, scoped, tag = 'scoped memory for tpu_custom_call.1']
    #allocation8 [shape = 'u8[65536]{0}', space=vmem, size = 0x10000, scoped, tag = 'input window, operand 2, single buffered']
    #allocation9 [shape = 'u8[65536]{0}', space=vmem, size = 0x10000, scoped, tag = 'input window, operand 5, single buffered']
    #allocation10 [shape = 's32[1]{0}', space=sflag, size = 0x4, scoped, tag = 'scoped memory for tpu_custom_call.1']
    #allocation11 [shape = 'u8[8192]{0}', space=vmem, size = 0x2000, scoped, tag = 'output window, operand 0, single buffered']
    %12 = vsyncpa [#allocation4], 0
    %13 = vsyncpa [#allocation7], 0
    %14 = vsyncpa [#allocation10], 0
    %15 = vsyncpa [#allocation5], 0
    // Predicated region
    $region2: #{tpu_custom_call.1} parent=1 // pred_check
      _
    $region3: #{tpu_custom_call.1} parent=1 // pred_check_branch
      %17 = sbr.rel (0) target = $region5
    $region4: #{tpu_custom_call.1} parent=1 // pred_region
      %s19 = ssub.s32 256, 256
      %20 = vsyncadd [#allocation4], %s19
      %s21 = sshll.u32 [#allocation3], 4
      %s22 = int_to_ptr.vmem [resolvable:$true] %s21
      %27 = dma.hbm_to_vmem [thread:$0]  %s0, 256, %s22, [#allocation4], 128, 128, 8
    $region5: #{tpu_custom_call.1} parent=1 // pred_fallthru
      _
    // Predicated region
    $region6: #{tpu_custom_call.1} parent=1 // pred_check
      _
    $region7: #{tpu_custom_call.1} parent=1 // pred_check_branch
      %29 = sbr.rel (0) target = $region9
    $region8: #{tpu_custom_call.1} parent=1 // pred_region
      %s31 = ssub.s32 2048, 2048
      %32 = vsyncadd [#allocation7], %s31
      %s33 = sshll.u32 [#allocation6], 4
      %s34 = int_to_ptr.vmem [resolvable:$true] %s33
      %39 = dma.hbm_to_vmem [thread:$0]  %s1, 2048, %s34, [#allocation7], 128, 128, 8
    $region9: #{tpu_custom_call.1} parent=1 // pred_fallthru
      _
    // Predicated region
    $region10: #{tpu_custom_call.1} parent=1 // pred_check
      _
    $region11: #{tpu_custom_call.1} parent=1 // pred_check_branch
      %41 = sbr.rel (0) target = $region13
    $region12: #{tpu_custom_call.1} parent=1 // pred_region
      %s43 = ssub.s32 2048, 2048
      %44 = vsyncadd [#allocation7], %s43
      %s45 = sshll.u32 [#allocation8], 4
      %s46 = int_to_ptr.vmem [resolvable:$true] %s45
      %51 = dma.hbm_to_vmem [thread:$0]  %s2, 2048, %s46, [#allocation7], 128, 128, 8
    $region13: #{tpu_custom_call.1} parent=1 // pred_fallthru
      _
    // Predicated region
    $region14: #{tpu_custom_call.1} parent=1 // pred_check
      _
    $region15: #{tpu_custom_call.1} parent=1 // pred_check_branch
      %53 = sbr.rel (0) target = $region17
    $region16: #{tpu_custom_call.1} parent=1 // pred_region
      _
    $region17: #{tpu_custom_call.1} parent=1 // pred_fallthru
      _
    // Predicated region
    $region18: #{tpu_custom_call.1} parent=1 // pred_check
      _
    $region19: #{tpu_custom_call.1} parent=1 // pred_check_branch
      %55 = sbr.rel (0) target = $region21
    $region20: #{tpu_custom_call.1} parent=1 // pred_region
      _
    $region21: #{tpu_custom_call.1} parent=1 // pred_fallthru
      _
    // Predicated region
    $region22: #{tpu_custom_call.1} parent=1 // pred_check
      _
    $region23: #{tpu_custom_call.1} parent=1 // pred_check_branch
      %57 = sbr.rel (0) target = $region25
    $region24: #{tpu_custom_call.1} parent=1 // pred_region
      %s59 = ssub.s32 2048, 2048
      %60 = vsyncadd [#allocation10], %s59
      %s61 = sshll.u32 [#allocation9], 4
      %s62 = int_to_ptr.vmem [resolvable:$true] %s61
      %67 = dma.hbm_to_vmem [thread:$0]  %s5, 2048, %s62, [#allocation10], 128, 128, 8
    $region25: #{tpu_custom_call.1} parent=1 // pred_fallthru
      _
    // Predicated region
    $region26: #{tpu_custom_call.1} parent=1 // pred_check
      _
    $region27: #{tpu_custom_call.1} parent=1 // pred_check_branch
      %69 = sbr.rel (0) target = $region29
    $region28: #{tpu_custom_call.1} parent=1 // pred_region
      _
    $region29: #{tpu_custom_call.1} parent=1 // pred_fallthru
      _
    // Predicated region
    $region30: #{tpu_custom_call.1} parent=1 // pred_check
      _
    $region31: #{tpu_custom_call.1} parent=1 // pred_check_branch
      %71 = sbr.rel (0) target = $region33
    $region32: #{tpu_custom_call.1} parent=1 // pred_region
      %72 = dma.done [#allocation4], 256
    $region33: #{tpu_custom_call.1} parent=1 // pred_fallthru
      _
    // Predicated region
    $region34: #{tpu_custom_call.1} parent=1 // pred_check
      _
    $region35: #{tpu_custom_call.1} parent=1 // pred_check_branch
      %74 = sbr.rel (0) target = $region37
    $region36: #{tpu_custom_call.1} parent=1 // pred_region
      %75 = dma.done [#allocation7], 2048
    $region37: #{tpu_custom_call.1} parent=1 // pred_fallthru
      _
    // Predicated region
    $region38: #{tpu_custom_call.1} parent=1 // pred_check
      _
    $region39: #{tpu_custom_call.1} parent=1 // pred_check_branch
      %77 = sbr.rel (0) target = $region41
    $region40: #{tpu_custom_call.1} parent=1 // pred_region
      %78 = dma.done [#allocation7], 2048
    $region41: #{tpu_custom_call.1} parent=1 // pred_fallthru
      _
    // Predicated region
    $region42: #{tpu_custom_call.1} parent=1 // pred_check
      _
    $region43: #{tpu_custom_call.1} parent=1 // pred_check_branch
      %80 = sbr.rel (0) target = $region45
    $region44: #{tpu_custom_call.1} parent=1 // pred_region
      %81 = dma.done [#allocation10], 2048
    $region45: #{tpu_custom_call.1} parent=1 // pred_fallthru
      _
    %p82 = scmp.eq.s32.totalorder 0, 0
    // Predicated region
    $region46: #{tpu_custom_call.1} parent=1 // pred_check
      %p83 = pneg %p82
    $region47: #{tpu_custom_call.1} parent=1 // pred_check_branch
      %85 = sbr.rel (%p83) target = $region49
    $region48: #{tpu_custom_call.1} parent=1 // pred_region
      %86 = vst [vmem:[#allocation2] sm:$0xff] 0.0
      %87 = vst [vmem:[#allocation2 + $0x8] sm:$0xff] 0.0
    $region49: #{tpu_custom_call.1} parent=1 // pred_fallthru
      _
    %v88 = vld [vmem:[#allocation3] sm:$0xff]
    %v89 = vld [vmem:[#allocation3 + $0x8] sm:$0xff]
    %v90 = vld [vmem:[#allocation6] sm:$0xff]
    %v91 = vld [vmem:[#allocation6 + $0x8] sm:$0xff]
    %v92 = vld [vmem:[#allocation6 + $0x10] sm:$0xff]
    %v93 = vld [vmem:[#allocation6 + $0x18] sm:$0xff]
    %v94 = vld [vmem:[#allocation6 + $0x20] sm:$0xff]
    %v95 = vld [vmem:[#allocation6 + $0x28] sm:$0xff]
    %v96 = vld [vmem:[#allocation6 + $0x30] sm:$0xff]
    %v97 = vld [vmem:[#allocation6 + $0x38] sm:$0xff]
    %v98 = vld [vmem:[#allocation6 + $0x40] sm:$0xff]
    %v99 = vld [vmem:[#allocation6 + $0x48] sm:$0xff]
    %v100 = vld [vmem:[#allocation6 + $0x50] sm:$0xff]
    %v101 = vld [vmem:[#allocation6 + $0x58] sm:$0xff]
    %v102 = vld [vmem:[#allocation6 + $0x60] sm:$0xff]
    %v103 = vld [vmem:[#allocation6 + $0x68] sm:$0xff]
    %v104 = vld [vmem:[#allocation6 + $0x70] sm:$0xff]
    %v105 = vld [vmem:[#allocation6 + $0x78] sm:$0xff]
    %v106 = vld [vmem:[%s3] sm:$0x1]
    %v108 = vlaneseq
    %v109 = vshrl.u32 %v108, 7
    %v110 = vsub.s32 0, %v109
    %v111 = vrot.slane %v106, %v110
    %113 = vmatprep.subr.mxu0 0.0
    %114 = vmatpush1.msra.mxu0 %v105
    %115 = vmatprep.subr.mxu0 0.0
    %116 = vmatpush1.msra.mxu0 %v104
    %117 = vmatprep.subr.mxu0 0.0
    %118 = vmatpush1.msra.mxu0 %v103
    %119 = vmatprep.subr.mxu0 0.0
    %120 = vmatpush1.msra.mxu0 %v102
    %121 = vmatprep.subr.mxu0 0.0
    %122 = vmatpush1.msra.mxu0 %v101
    %123 = vmatprep.subr.mxu0 0.0
    %124 = vmatpush1.msra.mxu0 %v100
    %125 = vmatprep.subr.mxu0 0.0
    %126 = vmatpush1.msra.mxu0 %v99
    %127 = vmatprep.subr.mxu0 0.0
    %128 = vmatpush1.msra.mxu0 %v98
    %129 = vmatprep.subr.mxu0 0.0
    %130 = vmatpush1.msra.mxu0 %v97
    %131 = vmatprep.subr.mxu0 0.0
    %132 = vmatpush1.msra.mxu0 %v96
    %133 = vmatprep.subr.mxu0 0.0
    %134 = vmatpush1.msra.mxu0 %v95
    %135 = vmatprep.subr.mxu0 0.0
    %136 = vmatpush1.msra.mxu0 %v94
    %137 = vmatprep.subr.mxu0 0.0
    %138 = vmatpush1.msra.mxu0 %v93
    %139 = vmatprep.subr.mxu0 0.0
    %140 = vmatpush1.msra.mxu0 %v92
    %141 = vmatprep.subr.mxu0 0.0
    %142 = vmatpush1.msra.mxu0 %v91
    %143 = vmatprep.subr.mxu0 0.0
    %144 = vmatpush1.msra.mxu0 %v90
    %145 = vmatprep.subr.mxu0 0.0
    %146 = vmatpush2.msra.mxu0 0.0
    %147 = vmatprep.subr.mxu0 0.0
    %148 = vmatpush2.msra.mxu0 0.0
    %149 = vmatprep.subr.mxu0 0.0
    %150 = vmatpush2.msra.mxu0 0.0
    %151 = vmatprep.subr.mxu0 0.0
    %152 = vmatpush2.msra.mxu0 0.0
    %153 = vmatprep.subr.mxu0 0.0
    %154 = vmatpush2.msra.mxu0 0.0
    %155 = vmatprep.subr.mxu0 0.0
    %156 = vmatpush2.msra.mxu0 0.0
    %157 = vmatprep.subr.mxu0 0.0
    %158 = vmatpush2.msra.mxu0 0.0
    %159 = vmatprep.subr.mxu0 0.0
    %160 = vmatpush2.msra.mxu0 0.0
    %161 = vmatprep.subr.mxu0 0.0
    %162 = vmatpush2.msra.mxu0 0.0
    %163 = vmatprep.subr.mxu0 0.0
    %164 = vmatpush2.msra.mxu0 0.0
    %165 = vmatprep.subr.mxu0 0.0
    %166 = vmatpush2.msra.mxu0 0.0
    %167 = vmatprep.subr.mxu0 0.0
    %168 = vmatpush2.msra.mxu0 0.0
    %169 = vmatprep.subr.mxu0 0.0
    %170 = vmatpush2.msra.mxu0 0.0
    %171 = vmatprep.subr.mxu0 0.0
    %172 = vmatpush2.msra.mxu0 0.0
    %173 = vmatprep.subr.mxu0 0.0
    %174 = vmatpush2.msra.mxu0 0.0
    %175 = vmatprep.subr.mxu0 0.0
    %176 = vmatpush2.msra.mxu0 0.0
    %177 = vmatprep.mubr.f32.mxu0 0.0
    %178 = vmatmul.mubr.f32.gmra.mxu0 %v88
    %v179 = vpop.f32.mrf.mxu0
    %v180 = vadd.f32 %v111, %v179
    %v181 = vpop.f32.mrf.mxu0
    %182 = vmatprep.mubr.f32.mxu0 0.0
    %183 = vmatmul.mubr.f32.gmra.mxu0 %v89
    %v184 = vpop.f32.mrf.mxu0
    %v185 = vadd.f32 %v111, %v184
    %v186 = vpop.f32.mrf.mxu0
    %187 = vdwg.mxu0
    %v188 = vld [vmem:[#allocation8] sm:$0xff]
    %v189 = vld [vmem:[#allocation8 + $0x8] sm:$0xff]
    %v190 = vld [vmem:[#allocation8 + $0x10] sm:$0xff]
    %v191 = vld [vmem:[#allocation8 + $0x18] sm:$0xff]
    %v192 = vld [vmem:[#allocation8 + $0x20] sm:$0xff]
    %v193 = vld [vmem:[#allocation8 + $0x28] sm:$0xff]
    %v194 = vld [vmem:[#allocation8 + $0x30] sm:$0xff]
    %v195 = vld [vmem:[#allocation8 + $0x38] sm:$0xff]
    %v196 = vld [vmem:[#allocation8 + $0x40] sm:$0xff]
    %v197 = vld [vmem:[#allocation8 + $0x48] sm:$0xff]
    %v198 = vld [vmem:[#allocation8 + $0x50] sm:$0xff]
    %v199 = vld [vmem:[#allocation8 + $0x58] sm:$0xff]
    %v200 = vld [vmem:[#allocation8 + $0x60] sm:$0xff]
    %v201 = vld [vmem:[#allocation8 + $0x68] sm:$0xff]
    %v202 = vld [vmem:[#allocation8 + $0x70] sm:$0xff]
    %v203 = vld [vmem:[#allocation8 + $0x78] sm:$0xff]
    %v204 = vld [vmem:[%s4] sm:$0x1]
    %v206 = vlaneseq
    %v207 = vshrl.u32 %v206, 7
    %v208 = vsub.s32 0, %v207
    %v209 = vrot.slane %v204, %v208
    %211 = vmatprep.subr.mxu0 0.0
    %212 = vmatpush1.msra.mxu0 %v203
    %213 = vmatprep.subr.mxu0 0.0
    %214 = vmatpush1.msra.mxu0 %v202
    %215 = vmatprep.subr.mxu0 0.0
    %216 = vmatpush1.msra.mxu0 %v201
    %217 = vmatprep.subr.mxu0 0.0
    %218 = vmatpush1.msra.mxu0 %v200
    %219 = vmatprep.subr.mxu0 0.0
    %220 = vmatpush1.msra.mxu0 %v199
    %221 = vmatprep.subr.mxu0 0.0
    %222 = vmatpush1.msra.mxu0 %v198
    %223 = vmatprep.subr.mxu0 0.0
    %224 = vmatpush1.msra.mxu0 %v197
    %225 = vmatprep.subr.mxu0 0.0
    %226 = vmatpush1.msra.mxu0 %v196
    %227 = vmatprep.subr.mxu0 0.0
    %228 = vmatpush1.msra.mxu0 %v195
    %229 = vmatprep.subr.mxu0 0.0
    %230 = vmatpush1.msra.mxu0 %v194
    %231 = vmatprep.subr.mxu0 0.0
    %232 = vmatpush1.msra.mxu0 %v193
    %233 = vmatprep.subr.mxu0 0.0
    %234 = vmatpush1.msra.mxu0 %v192
    %235 = vmatprep.subr.mxu0 0.0
    %236 = vmatpush1.msra.mxu0 %v191
    %237 = vmatprep.subr.mxu0 0.0
    %238 = vmatpush1.msra.mxu0 %v190
    %239 = vmatprep.subr.mxu0 0.0
    %240 = vmatpush1.msra.mxu0 %v189
    %241 = vmatprep.subr.mxu0 0.0
    %242 = vmatpush1.msra.mxu0 %v188
    %243 = vmatprep.subr.mxu0 0.0
    %244 = vmatpush2.msra.mxu0 0.0
    %245 = vmatprep.subr.mxu0 0.0
    %246 = vmatpush2.msra.mxu0 0.0
    %247 = vmatprep.subr.mxu0 0.0
    %248 = vmatpush2.msra.mxu0 0.0
    %249 = vmatprep.subr.mxu0 0.0
    %250 = vmatpush2.msra.mxu0 0.0
    %251 = vmatprep.subr.mxu0 0.0
    %252 = vmatpush2.msra.mxu0 0.0
    %253 = vmatprep.subr.mxu0 0.0
    %254 = vmatpush2.msra.mxu0 0.0
    %255 = vmatprep.subr.mxu0 0.0
    %256 = vmatpush2.msra.mxu0 0.0
    %257 = vmatprep.subr.mxu0 0.0
    %258 = vmatpush2.msra.mxu0 0.0
    %259 = vmatprep.subr.mxu0 0.0
    %260 = vmatpush2.msra.mxu0 0.0
    %261 = vmatprep.subr.mxu0 0.0
    %262 = vmatpush2.msra.mxu0 0.0
    %263 = vmatprep.subr.mxu0 0.0
    %264 = vmatpush2.msra.mxu0 0.0
    %265 = vmatprep.subr.mxu0 0.0
    %266 = vmatpush2.msra.mxu0 0.0
    %267 = vmatprep.subr.mxu0 0.0
    %268 = vmatpush2.msra.mxu0 0.0
    %269 = vmatprep.subr.mxu0 0.0
    %270 = vmatpush2.msra.mxu0 0.0
    %271 = vmatprep.subr.mxu0 0.0
    %272 = vmatpush2.msra.mxu0 0.0
    %273 = vmatprep.subr.mxu0 0.0
    %274 = vmatpush2.msra.mxu0 0.0
    %275 = vmatprep.mubr.f32.mxu0 0.0
    %276 = vmatmul.mubr.f32.gmra.mxu0 %v88
    %v277 = vpop.f32.mrf.mxu0
    %v278 = vadd.f32 %v209, %v277
    %v279 = vpop.f32.mrf.mxu0
    %280 = vmatprep.mubr.f32.mxu0 0.0
    %281 = vmatmul.mubr.f32.gmra.mxu0 %v89
    %v282 = vpop.f32.mrf.mxu0
    %v283 = vadd.f32 %v209, %v282
    %v284 = vpop.f32.mrf.mxu0
    %285 = vdwg.mxu0
    %v286 = vmul.f32 %v278, 0.5
    %v287 = vmul.f32 %v283, 0.5
    %v288 = vmul.f32 %v278, 0.70710677
    %v289 = vmul.f32 %v283, 0.70710677
    %v290 = verf.f32.pop %v288
    %v291 = verf.f32.pop %v289
    %v292 = vadd.f32 %v290, 1.0
    %v293 = vadd.f32 %v291, 1.0
    %v294 = vmul.f32 %v286, %v292
    %v295 = vmul.f32 %v287, %v293
    %v296 = vmul.f32 %v180, %v294
    %v297 = vmul.f32 %v185, %v295
    %v298 = vld [vmem:[#allocation2] sm:$0xff]
    %v299 = vld [vmem:[#allocation2 + $0x8] sm:$0xff]
    %v300 = vld [vmem:[#allocation9] sm:$0xff]
    %v301 = vld [vmem:[#allocation9 + $0x8] sm:$0xff]
    %v302 = vld [vmem:[#allocation9 + $0x10] sm:$0xff]
    %v303 = vld [vmem:[#allocation9 + $0x18] sm:$0xff]
    %v304 = vld [vmem:[#allocation9 + $0x20] sm:$0xff]
    %v305 = vld [vmem:[#allocation9 + $0x28] sm:$0xff]
    %v306 = vld [vmem:[#allocation9 + $0x30] sm:$0xff]
    %v307 = vld [vmem:[#allocation9 + $0x38] sm:$0xff]
    %v308 = vld [vmem:[#allocation9 + $0x40] sm:$0xff]
    %v309 = vld [vmem:[#allocation9 + $0x48] sm:$0xff]
    %v310 = vld [vmem:[#allocation9 + $0x50] sm:$0xff]
    %v311 = vld [vmem:[#allocation9 + $0x58] sm:$0xff]
    %v312 = vld [vmem:[#allocation9 + $0x60] sm:$0xff]
    %v313 = vld [vmem:[#allocation9 + $0x68] sm:$0xff]
    %v314 = vld [vmem:[#allocation9 + $0x70] sm:$0xff]
    %v315 = vld [vmem:[#allocation9 + $0x78] sm:$0xff]
    %316 = vmatprep.subr.mxu0 0.0
    %317 = vmatpush1.msra.mxu0 %v315
    %318 = vmatprep.subr.mxu0 0.0
    %319 = vmatpush1.msra.mxu0 %v314
    %320 = vmatprep.subr.mxu0 0.0
    %321 = vmatpush1.msra.mxu0 %v313
    %322 = vmatprep.subr.mxu0 0.0
    %323 = vmatpush1.msra.mxu0 %v312
    %324 = vmatprep.subr.mxu0 0.0
    %325 = vmatpush1.msra.mxu0 %v311
    %326 = vmatprep.subr.mxu0 0.0
    %327 = vmatpush1.msra.mxu0 %v310
    %328 = vmatprep.subr.mxu0 0.0
    %329 = vmatpush1.msra.mxu0 %v309
    %330 = vmatprep.subr.mxu0 0.0
    %331 = vmatpush1.msra.mxu0 %v308
    %332 = vmatprep.subr.mxu0 0.0
    %333 = vmatpush1.msra.mxu0 %v307
    %334 = vmatprep.subr.mxu0 0.0
    %335 = vmatpush1.msra.mxu0 %v306
    %336 = vmatprep.subr.mxu0 0.0
    %337 = vmatpush1.msra.mxu0 %v305
    %338 = vmatprep.subr.mxu0 0.0
    %339 = vmatpush1.msra.mxu0 %v304
    %340 = vmatprep.subr.mxu0 0.0
    %341 = vmatpush1.msra.mxu0 %v303
    %342 = vmatprep.subr.mxu0 0.0
    %343 = vmatpush1.msra.mxu0 %v302
    %344 = vmatprep.subr.mxu0 0.0
    %345 = vmatpush1.msra.mxu0 %v301
    %346 = vmatprep.subr.mxu0 0.0
    %347 = vmatpush1.msra.mxu0 %v300
    %348 = vmatprep.subr.mxu0 0.0
    %349 = vmatpush2.msra.mxu0 0.0
    %350 = vmatprep.subr.mxu0 0.0
    %351 = vmatpush2.msra.mxu0 0.0
    %352 = vmatprep.subr.mxu0 0.0
    %353 = vmatpush2.msra.mxu0 0.0
    %354 = vmatprep.subr.mxu0 0.0
    %355 = vmatpush2.msra.mxu0 0.0
    %356 = vmatprep.subr.mxu0 0.0
    %357 = vmatpush2.msra.mxu0 0.0
    %358 = vmatprep.subr.mxu0 0.0
    %359 = vmatpush2.msra.mxu0 0.0
    %360 = vmatprep.subr.mxu0 0.0
    %361 = vmatpush2.msra.mxu0 0.0
    %362 = vmatprep.subr.mxu0 0.0
    %363 = vmatpush2.msra.mxu0 0.0
    %364 = vmatprep.subr.mxu0 0.0
    %365 = vmatpush2.msra.mxu0 0.0
    %366 = vmatprep.subr.mxu0 0.0
    %367 = vmatpush2.msra.mxu0 0.0
    %368 = vmatprep.subr.mxu0 0.0
    %369 = vmatpush2.msra.mxu0 0.0
    %370 = vmatprep.subr.mxu0 0.0
    %371 = vmatpush2.msra.mxu0 0.0
    %372 = vmatprep.subr.mxu0 0.0
    %373 = vmatpush2.msra.mxu0 0.0
    %374 = vmatprep.subr.mxu0 0.0
    %375 = vmatpush2.msra.mxu0 0.0
    %376 = vmatprep.subr.mxu0 0.0
    %377 = vmatpush2.msra.mxu0 0.0
    %378 = vmatprep.subr.mxu0 0.0
    %379 = vmatpush2.msra.mxu0 0.0
    %380 = vmatprep.mubr.f32.mxu0 0.0
    %381 = vmatmul.mubr.f32.gmra.mxu0 %v296
    %v382 = vpop.f32.mrf.mxu0
    %v383 = vadd.f32 0.0, %v382
    %v384 = vpop.f32.mrf.mxu0
    %385 = vmatprep.mubr.f32.mxu0 0.0
    %386 = vmatmul.mubr.f32.gmra.mxu0 %v297
    %v387 = vpop.f32.mrf.mxu0
    %v388 = vadd.f32 0.0, %v387
    %v389 = vpop.f32.mrf.mxu0
    %390 = vdwg.mxu0
    %v391 = vadd.f32 %v298, %v383
    %v392 = vadd.f32 %v299, %v388
    %393 = vst [vmem:[#allocation2] sm:$0xff] %v391
    %394 = vst [vmem:[#allocation2 + $0x8] sm:$0xff] %v392
    // Predicated region
    $region50: #{tpu_custom_call.1} parent=1 // pred_check
      %p395 = pneg %p82
    $region51: #{tpu_custom_call.1} parent=1 // pred_check_branch
      %397 = sbr.rel (%p395) target = $region53
    $region52: #{tpu_custom_call.1} parent=1 // pred_region
      %v398 = vld [vmem:[#allocation2] sm:$0xff]
      %v399 = vld [vmem:[#allocation2 + $0x8] sm:$0xff]
      %v400 = vld [vmem:[%s6] sm:$0x1]
      %v402 = vlaneseq
      %v403 = vshrl.u32 %v402, 7
      %v404 = vsub.s32 0, %v403
      %v405 = vrot.slane %v400, %v404
      %v407 = vadd.f32 %v398, %v405
      %v408 = vadd.f32 %v399, %v405
      %409 = vst [vmem:[#allocation11] sm:$0xff] %v407
      %410 = vst [vmem:[#allocation11 + $0x8] sm:$0xff] %v408
    $region53: #{tpu_custom_call.1} parent=1 // pred_fallthru
      _
    // Predicated region
    $region54: #{tpu_custom_call.1} parent=1 // pred_check
      _
    $region55: #{tpu_custom_call.1} parent=1 // pred_check_branch
      %412 = sbr.rel (0) target = $region57
    $region56: #{tpu_custom_call.1} parent=1 // pred_region
      %s414 = ssub.s32 256, 256
      %415 = vsyncadd [#allocation5], %s414
      %s416 = sshll.u32 [#allocation11], 4
      %s417 = int_to_ptr.vmem [resolvable:$true] %s416
      %422 = dma.vmem_to_hbm [thread:$0]  %s417, 256, %s7, [#allocation5], 128, 128, 8
    $region57: #{tpu_custom_call.1} parent=1 // pred_fallthru
      _
    // Predicated region
    $region58: #{tpu_custom_call.1} parent=1 // pred_check
      _
    $region59: #{tpu_custom_call.1} parent=1 // pred_check_branch
      %424 = sbr.rel (0) target = $region61
    $region60: #{tpu_custom_call.1} parent=1 // pred_region
      %425 = dma.done [#allocation5], 256
    $region61: #{tpu_custom_call.1} parent=1 // pred_fallthru
      _
    %426 = vsyncpa [#allocation4], 1
    %427 = vsyncpa [#allocation7], 1
    %428 = vsyncpa [#allocation10], 1
    %429 = vsyncpa [#allocation5], 1

</llo_original>
